<compile_context>
chip_gen: v6e
topology: v6e:2x2x1
jax: 0.10.0
libtpu: 0.0.40
codegen_flags: <defaults>
</compile_context>

<pallas_src>
import functools

import jax
import jax.numpy as jnp
from jax import lax
from jax.experimental import pallas as pl
from jax.experimental.pallas import tpu as pltpu

LANES = 128
SUBLANES = 8
TILE_ELEMS = SUBLANES * LANES            # 1024 elements = one f32 vreg
MAX_BLOCK_ROWS = 2048                    # 1 MiB / input / pipeline buffer
CHUNK_ROWS = 256                         # inner-loop granularity (32 vregs live)
SMALL_N_THRESHOLD = 1 << 18              # below this, plain jnp beats launch cost


@functools.lru_cache(maxsize=None)
def _num_shards_for_backend():
    """2 only on multi-TensorCore chips (v7x); single-TC v5e/v6e get 1."""
    try:
        kind = jax.devices()[0].device_kind.lower()
    except Exception:
        return 1
    return 2 if "v7" in kind else 1


def _mse_kernel(x_ref, y_ref, o_ref, *, num_blocks, steps_per_shard,
                block_rows, chunk_rows):
    s = pl.program_id(0)   # shard (parallel axis)
    i = pl.program_id(1)   # reduction step within shard (arbitrary axis)

    @pl.when(i == 0)
    def _init():
        o_ref[...] = jnp.zeros_like(o_ref)

    # At most one over-provisioned filler step (last shard, odd num_blocks):
    # its DMA re-reads a valid block via the clamped index_map and a single
    # scalar gate skips the accumulate.  No per-element mask anywhere.
    @pl.when(s * steps_per_shard + i < num_blocks)
    def _accumulate():
        n_chunks = block_rows // chunk_rows

        def body(c, acc):
            r = pl.multiple_of(c * chunk_rows, chunk_rows)
            xd = x_ref[pl.ds(r, chunk_rows), :].astype(jnp.float32)
            yd = y_ref[pl.ds(r, chunk_rows), :].astype(jnp.float32)
            d = xd - yd
            # Fold the chunk into a vreg-shaped (8, 128) partial sum with pure
            # VPU adds; the tiny cross-lane reduce happens in the wrapper.
            return acc + (d * d).reshape(
                chunk_rows // SUBLANES, SUBLANES, LANES).sum(axis=0)

        acc = lax.fori_loop(0, n_chunks, body,
                            jnp.zeros((SUBLANES, LANES), jnp.float32),
                            unroll=True)
        o_ref[...] += acc


def _mse_sum_pallas(x2, y2, *, num_blocks, block_rows, chunk_rows, num_shards):
    """Sum of squared differences over the aligned prefix (f32 scalar)."""
    steps = pl.cdiv(num_blocks, num_shards)

    def in_map(s, i):
        # Clamp so the (at most one) filler step re-reads the last valid
        # block; its contribution is skipped by the in-kernel scalar gate.
        return (jnp.minimum(s * steps + i, num_blocks - 1), 0)

    partials = pl.pallas_call(
        functools.partial(_mse_kernel, num_blocks=num_blocks,
                          steps_per_shard=steps, block_rows=block_rows,
                          chunk_rows=chunk_rows),
        out_shape=jax.ShapeDtypeStruct((num_shards, SUBLANES, LANES),
                                       jnp.float32),
        grid_spec=pltpu.PrefetchScalarGridSpec(
            num_scalar_prefetch=0,
            grid=(num_shards, steps),
            in_specs=[
                pl.BlockSpec((block_rows, LANES), in_map),
                pl.BlockSpec((block_rows, LANES), in_map),
            ],
            out_specs=pl.BlockSpec((None, SUBLANES, LANES),
                                   lambda s, i: (s, 0, 0)),
        ),
        compiler_params=pltpu.CompilerParams(
            dimension_semantics=("parallel", "arbitrary"),
        ),
    )(x2, y2)

    # Tiny final reduction (num_shards * 8 * 128 f32), fused inside the jit.
    return jnp.sum(partials)


@functools.partial(jax.jit, static_argnames=("force_pallas",))
def mse_loss(inputs, targets, force_pallas=False):
    """Mean squared error over all elements (f32 accumulation)."""
    assert inputs.shape == targets.shape, "MSELoss requires matching shapes"
    n = inputs.size

    x = jnp.ravel(inputs)
    y = jnp.ravel(targets)

    full_tiles = n // TILE_ELEMS
    use_pallas = full_tiles > 0 and (force_pallas or n >= SMALL_N_THRESHOLD)
    if not use_pallas:
        # Small-input fast path: arithmetic is far cheaper than kernel launch.
        d = x.astype(jnp.float32) - y.astype(jnp.float32)
        return jnp.sum(d * d) / jnp.float32(n)

    block_rows = min(MAX_BLOCK_ROWS, full_tiles * SUBLANES)   # multiple of 8
    chunk_rows = CHUNK_ROWS if block_rows % CHUNK_ROWS == 0 else block_rows
    block_elems = block_rows * LANES
    num_blocks = n // block_elems                             # >= 1
    n_main = num_blocks * block_elems
    num_shards = min(_num_shards_for_backend(), num_blocks)

    # Kernel runs only on the block-aligned prefix: no jnp.pad copies, no
    # partial blocks, no in-kernel element masks.
    x_main = x if n_main == n else x[:n_main]
    y_main = y if n_main == n else y[:n_main]
    x2 = x_main.reshape(num_blocks * block_rows, LANES)
    y2 = y_main.reshape(num_blocks * block_rows, LANES)

    total = _mse_sum_pallas(x2, y2, num_blocks=num_blocks,
                            block_rows=block_rows, chunk_rows=chunk_rows,
                            num_shards=num_shards)

    if n_main != n:
        # Ragged tail (< block_elems elements) summed with plain jnp, fused
        # into the same jitted dispatch.
        dt = x[n_main:].astype(jnp.float32) - y[n_main:].astype(jnp.float32)
        total = total + jnp.sum(dt * dt)

    return total / jnp.float32(n)


def mse_loss_module_forward(inputs, targets):
    """Mirrors MSELoss.forward: returns (loss, {'T': loss.item()})."""
    loss = mse_loss(inputs, targets)
    # float(loss) mirrors torch's .item(): it forces a host sync per call.
    return loss, {"T": float(loss)}


if __name__ == "__main__":
    key = jax.random.PRNGKey(0)
    k1, k2 = jax.random.split(key)

    # Small NCHW-like shape (layout is irrelevant for an elementwise-mean loss).
    shape = (2, 4, 16, 16)
    inputs = jax.random.normal(k1, shape, dtype=jnp.float32)
    targets = jax.random.normal(k2, shape, dtype=jnp.float32)
    ref = jnp.mean((inputs - targets) ** 2)

    # Force the Pallas path on the small example so the kernel itself runs.
    kernel_loss = jax.block_until_ready(mse_loss(inputs, targets,
                                                 force_pallas=True))
    assert jnp.allclose(kernel_loss, ref, rtol=1e-4, atol=1e-6), (kernel_loss, ref)

    # Module-forward semantics (default dispatch: fast path at this size).
    loss, aux = mse_loss_module_forward(inputs, targets)
    loss = jax.block_until_ready(loss)
    assert jnp.allclose(loss, ref, rtol=1e-4, atol=1e-6), (loss, ref)
    assert abs(aux["T"] - float(ref)) <= 1e-4 * abs(float(ref)) + 1e-6, (
        aux["T"], float(ref))

    # Extra checks: small fast path, kernel + jnp tail, multi-block
    # accumulation with a gated filler step, and a 1-element ragged tail.
    for idx, extra_shape in enumerate([(3, 5, 7), (6, 8, 64, 128),
                                       (3, 2048, 128), (1, 786433)]):
        ka, kb = jax.random.split(jax.random.PRNGKey(idx + 1))
        a = jax.random.normal(ka, extra_shape, dtype=jnp.float32)
        b = jax.random.normal(kb, extra_shape, dtype=jnp.float32)
        got = jax.block_until_ready(mse_loss(a, b))
        want = jnp.mean((a - b) ** 2)
        assert jnp.allclose(got, want, rtol=1e-4, atol=1e-6), (extra_shape, got, want)

    print("KERNEL_OK")
</pallas_src>

<mosaic_0001>
module attributes {stable_mosaic.version = 11 : i64} {
  func.func @_mse_kernel(%arg0: i32, %arg1: i32, %arg2: memref<16x128xf32, #tpu.memory_space<vmem>>, %arg3: memref<16x128xf32, #tpu.memory_space<vmem>>, %arg4: memref<1x8x128xf32, #tpu.memory_space<vmem>>) attributes {dimension_semantics = [#tpu.dimension_semantics<parallel>, #tpu.dimension_semantics<arbitrary>], iteration_bounds = array<i64: 1, 1>, scalar_prefetch = 0 : i64, scratch_operands = 0 : i64, tpu.core_type = #tpu.core_type<tc>, window_params = [{transform_indices = @transform_0, window_bounds = array<i64: 16, 128>}, {transform_indices = @transform_1, window_bounds = array<i64: 16, 128>}, {transform_indices = @transform_2, window_bounds = array<i64: 1, 8, 128>}]} {
    %c0_i32 = arith.constant 0 : i32
    %0 = arith.cmpi eq, %arg1, %c0_i32 : i32
    %1 = arith.extui %0 : i1 to i32
    %c0_i32_0 = arith.constant 0 : i32
    %2 = arith.cmpi ne, %1, %c0_i32_0 : i32
    scf.if %2 {
      %cst = arith.constant 0.000000e+00 : f32
      %8 = vector.broadcast %cst : f32 to vector<8x128xf32>
      %c0 = arith.constant 0 : index
      %c0_3 = arith.constant 0 : index
      %c0_4 = arith.constant 0 : index
      %9 = vector.load %arg4[%c0, %c0_3, %c0_4] : memref<1x8x128xf32, #tpu.memory_space<vmem>>, vector<1x8x128xf32>
      %10 = vector.shape_cast %9 : vector<1x8x128xf32> to vector<8x128xf32>
      %11 = vector.shape_cast %8 : vector<8x128xf32> to vector<1x8x128xf32>
      tpu.vector_store %arg4[%c0, %c0_3, %c0_4], %11 {strides = array<i32>} : memref<1x8x128xf32, #tpu.memory_space<vmem>>, vector<1x8x128xf32>,
    } else {
    }
    %c1_i32 = arith.constant 1 : i32
    %3 = arith.muli %arg0, %c1_i32 : i32
    %4 = arith.addi %3, %arg1 : i32
    %c1_i32_1 = arith.constant 1 : i32
    %5 = arith.cmpi slt, %4, %c1_i32_1 : i32
    %6 = arith.extui %5 : i1 to i32
    %c0_i32_2 = arith.constant 0 : i32
    %7 = arith.cmpi ne, %6, %c0_i32_2 : i32
    scf.if %7 {
      %cst = arith.constant 0.000000e+00 : f32
      %8 = vector.broadcast %cst : f32 to vector<8x128xf32>
      %c0_i32_3 = arith.constant 0 : i32
      %c16_i32 = arith.constant 16 : i32
      %9 = arith.muli %c0_i32_3, %c16_i32 : i32
      %10 = tpu.assume_multiple %9, 16 : i32
      %11 = arith.index_cast %10 : i32 to index
      %c0 = arith.constant 0 : index
      %12 = vector.load %arg2[%11, %c0] : memref<16x128xf32, #tpu.memory_space<vmem>>, vector<16x128xf32>
      %13 = arith.index_cast %10 : i32 to index
      %c0_4 = arith.constant 0 : index
      %14 = vector.load %arg3[%13, %c0_4] : memref<16x128xf32, #tpu.memory_space<vmem>>, vector<16x128xf32>
      %15 = arith.subf %12, %14 : vector<16x128xf32>
      %16 = arith.mulf %15, %15 : vector<16x128xf32>
      %17 = vector.shape_cast %16 : vector<16x128xf32> to vector<2x8x128xf32>
      %cst_5 = arith.constant dense<0.000000e+00> : vector<8x128xf32>
      %18 = vector.multi_reduction <add>, %17, %cst_5 [0] : vector<2x8x128xf32> to vector<8x128xf32>
      %19 = arith.addf %8, %18 : vector<8x128xf32>
      %c1_i32_6 = arith.constant 1 : i32
      %c0_7 = arith.constant 0 : index
      %c0_8 = arith.constant 0 : index
      %c0_9 = arith.constant 0 : index
      %20 = vector.load %arg4[%c0_7, %c0_8, %c0_9] : memref<1x8x128xf32, #tpu.memory_space<vmem>>, vector<1x8x128xf32>
      %21 = vector.shape_cast %20 : vector<1x8x128xf32> to vector<8x128xf32>
      %22 = arith.addf %21, %19 : vector<8x128xf32>
      %c0_10 = arith.constant 0 : index
      %c0_11 = arith.constant 0 : index
      %c0_12 = arith.constant 0 : index
      %23 = vector.load %arg4[%c0_10, %c0_11, %c0_12] : memref<1x8x128xf32, #tpu.memory_space<vmem>>, vector<1x8x128xf32>
      %24 = vector.shape_cast %23 : vector<1x8x128xf32> to vector<8x128xf32>
      %25 = vector.shape_cast %22 : vector<8x128xf32> to vector<1x8x128xf32>
      tpu.vector_store %arg4[%c0_10, %c0_11, %c0_12], %25 {strides = array<i32>} : memref<1x8x128xf32, #tpu.memory_space<vmem>>, vector<1x8x128xf32>,
    } else {
    }
    return
  }
  func.func @transform_0(%arg0: i32, %arg1: i32) -> (i32, i32) {
    %c1_i32 = arith.constant 1 : i32
    %0 = arith.muli %arg0, %c1_i32 : i32
    %1 = arith.addi %0, %arg1 : i32
    %c0_i32 = arith.constant 0 : i32
    %2 = arith.minsi %1, %c0_i32 : i32
    %c0_i32_0 = arith.constant 0 : i32
    %c0_i32_1 = arith.constant 0 : i32
    return %2, %c0_i32_0 : i32, i32
  }
  func.func @transform_1(%arg0: i32, %arg1: i32) -> (i32, i32) {
    %c1_i32 = arith.constant 1 : i32
    %0 = arith.muli %arg0, %c1_i32 : i32
    %1 = arith.addi %0, %arg1 : i32
    %c0_i32 = arith.constant 0 : i32
    %2 = arith.minsi %1, %c0_i32 : i32
    %c0_i32_0 = arith.constant 0 : i32
    %c0_i32_1 = arith.constant 0 : i32
    return %2, %c0_i32_0 : i32, i32
  }
  func.func @transform_2(%arg0: i32, %arg1: i32) -> (i32, i32, i32) {
    %c0_i32 = arith.constant 0 : i32
    %c0_i32_0 = arith.constant 0 : i32
    %c0_i32_1 = arith.constant 0 : i32
    return %arg0, %c0_i32, %c0_i32_0 : i32, i32, i32
  }
}

</mosaic_0001>

<llo_original>
// kernel: mse_loss.1
$region0: #{mse_loss.1}
  #allocation0 [shape = 'u32[]', space=smem, size = 0x4, offset = 0x4, fixed_abs, tag = 'smem constant byte address 0x4 - core index']
  #allocation1 [shape = 'u32[144,128]{1,0:T(1,128)}', space=vmem, size = 0x12000, scoped, tag = 'internal scratch']
  %s0 = inlined_call_operand.vmem [shape: f32[16,128], index: 0, kind: input, shape index: {}]
  %s1 = inlined_call_operand.vmem [shape: f32[16,128], index: 1, kind: input, shape index: {}]
  %s2 = inlined_call_operand.vmem [shape: f32[1,8,128], index: 2, kind: output, shape index: {}]
  %s3 = sld [smem:[#allocation0]]
  $region26: #{mse_loss.1} parent=0
    _
  %s5 = ssub.s32 1, %s3
  %s6 = scalar_select 0, %s5, %s3
  // Predicated region
  $region2: #{mse_loss.1} parent=0 // pred_check
    _
  $region3: #{mse_loss.1} parent=0 // pred_check_branch
    %8 = sbr.rel (0) target = $region5
  $region4: #{mse_loss.1} parent=0 // pred_region
    %s9 = sadd.s32 0, 0
    %p10 = scmp.lt.s32.totalorder %s9, 0
    %s11 = scalar_select %p10, %s9, 0
    %s12 = smul.u32 2, %s11
    %p13 = scmp.lt.s32.totalorder %s12, 1
    %s14 = scalar_select %p13, %s12, 1
    %s15 = smul.addr %s14, 8
    %s16 = scalar_lea.vmem %s0, %s15
    %s17 = sadd.s32 0, 0
    %p18 = scmp.lt.s32.totalorder %s17, 0
    %s19 = scalar_select %p18, %s17, 0
    %s20 = smul.u32 2, %s19
  $region5: #{mse_loss.1} parent=0 // pred_fallthru
    _
  // Predicated region
  $region6: #{mse_loss.1} parent=0 // pred_check
    _
  $region7: #{mse_loss.1} parent=0 // pred_check_branch
    %22 = sbr.rel (0) target = $region9
  $region8: #{mse_loss.1} parent=0 // pred_region
    %s23 = sadd.s32 0, 0
    %p24 = scmp.lt.s32.totalorder %s23, 0
    %s25 = scalar_select %p24, %s23, 0
    %s26 = smul.u32 2, %s25
    %p27 = scmp.lt.s32.totalorder %s26, 1
    %s28 = scalar_select %p27, %s26, 1
    %s29 = smul.addr %s28, 8
    %s30 = scalar_lea.vmem %s1, %s29
    %s31 = sadd.s32 0, 0
    %p32 = scmp.lt.s32.totalorder %s31, 0
    %s33 = scalar_select %p32, %s31, 0
    %s34 = smul.u32 2, %s33
  $region9: #{mse_loss.1} parent=0 // pred_fallthru
    _
  %s35 = sadd.s32 0, 0
  %p36 = scmp.lt.s32.totalorder %s35, 0
  %s37 = scalar_select %p36, %s35, 0
  %s38 = smul.u32 2, %s37
  %p39 = scmp.lt.s32.totalorder %s38, 1
  %s40 = scalar_select %p39, %s38, 1
  %s41 = smul.addr %s40, 8
  %s42 = scalar_lea.vmem %s0, %s41
  %s43 = sadd.s32 0, 0
  %p44 = scmp.lt.s32.totalorder %s43, 0
  %s45 = scalar_select %p44, %s43, 0
  %s46 = smul.u32 2, %s45
  %p47 = scmp.lt.s32.totalorder %s46, 1
  %s48 = scalar_select %p47, %s46, 1
  %s49 = smul.addr %s48, 8
  %s50 = scalar_lea.vmem %s1, %s49
  %s51 = sadd.s32 0, 0
  %p52 = scmp.lt.s32.totalorder %s51, 0
  %s53 = scalar_select %p52, %s51, 0
  %s54 = smul.u32 2, %s53
  %p55 = scmp.lt.s32.totalorder %s54, 1
  %s56 = scalar_select %p55, %s54, 1
  %s57 = smul.addr %s56, 8
  %s58 = scalar_lea.vmem %s0, %s57
  %s59 = sadd.s32 0, 0
  %p60 = scmp.lt.s32.totalorder %s59, 0
  %s61 = scalar_select %p60, %s59, 0
  %s62 = smul.u32 2, %s61
  %s63 = sadd.s32 0, 0
  %p64 = scmp.lt.s32.totalorder %s63, 0
  %s65 = scalar_select %p64, %s63, 0
  %s66 = smul.u32 2, %s65
  %p67 = scmp.lt.s32.totalorder %s66, 1
  %s68 = scalar_select %p67, %s66, 1
  %s69 = smul.addr %s68, 8
  %s70 = scalar_lea.vmem %s1, %s69
  %s71 = sadd.s32 0, 0
  %p72 = scmp.lt.s32.totalorder %s71, 0
  %s73 = scalar_select %p72, %s71, 0
  %s74 = smul.u32 2, %s73
  %p75 = scmp.eq.s32.totalorder 0, 0
  // Predicated region
  $region10: #{mse_loss.1} parent=0 // pred_check
    %p76 = pneg %p75
  $region11: #{mse_loss.1} parent=0 // pred_check_branch
    %78 = sbr.rel (%p76) target = $region13
  $region12: #{mse_loss.1} parent=0 // pred_region
    %79 = vst [vmem:[%s2] sm:$0xff] 0.0
  $region13: #{mse_loss.1} parent=0 // pred_fallthru
    _
  %s80 = sadd.s32 0, 0
  %p81 = scmp.lt.s32.totalorder %s80, 1
  // Predicated region
  $region14: #{mse_loss.1} parent=0 // pred_check
    %p82 = pneg %p81
  $region15: #{mse_loss.1} parent=0 // pred_check_branch
    %84 = sbr.rel (%p82) target = $region17
  $region16: #{mse_loss.1} parent=0 // pred_region
    %v85 = vld [vmem:[%s58] sm:$0xff]
    %v86 = vld [vmem:[%s58 + $0x8] sm:$0xff]
    %v87 = vld [vmem:[%s70] sm:$0xff]
    %v88 = vld [vmem:[%s70 + $0x8] sm:$0xff]
    %v89 = vsub.f32 %v85, %v87
    %v90 = vsub.f32 %v86, %v88
    %v91 = vmul.f32 %v89, %v89
    %v92 = vmul.f32 %v90, %v90
    %v93 = vadd.f32 %v91, %v92
    %v94 = vadd.f32 %v93, 0.0
    %v95 = vld [vmem:[%s2] sm:$0xff]
    %v96 = vadd.f32 %v95, %v94
    %97 = vst [vmem:[%s2] sm:$0xff] %v96
  $region17: #{mse_loss.1} parent=0 // pred_fallthru
    _
  // Predicated region
  $region18: #{mse_loss.1} parent=0 // pred_check
    _
  $region19: #{mse_loss.1} parent=0 // pred_check_branch
    %99 = sbr.rel (0) target = $region21
  $region20: #{mse_loss.1} parent=0 // pred_region
    _
  $region21: #{mse_loss.1} parent=0 // pred_fallthru
    _
  // Predicated region
  $region22: #{mse_loss.1} parent=0 // pred_check
    _
  $region23: #{mse_loss.1} parent=0 // pred_check_branch
    %101 = sbr.rel (0) target = $region25
  $region24: #{mse_loss.1} parent=0 // pred_region
    _
  $region25: #{mse_loss.1} parent=0 // pred_fallthru
    _

</llo_original>
